<compile_context>
chip_gen: v7x
topology: tpu7x:2x2x1
jax: 0.10.0
libtpu: 0.0.40
codegen_flags: <defaults>
</compile_context>

<pallas_src>
import functools
import math

import jax
import jax.numpy as jnp
from jax import lax
from jax.experimental import pallas as pl
from jax.experimental.pallas import tpu as pltpu


def _attention1d_kernel(x_ref, w_ref, b_ref, y_ref, *, B, L, d_k, d_v):
    """x_ref: (B*L, D), w_ref: (D, 2*d_k+d_v), b_ref: (1, 2*d_k+d_v),
    y_ref: (B*L, d_v).  B, L, d_k, d_v are static."""
    # --- Fused K/Q/V projection: one flat 2-D GEMM on the MXU. ---
    proj = jnp.dot(x_ref[...], w_ref[...],
                   preferred_element_type=jnp.float32) + b_ref[...]

    # Static per-batch sublane slices + static lane slices of the fused proj.
    # (B is small and static -> fully unrolled; everything stays 2-D.)
    K = [proj[b * L:(b + 1) * L, 0 * d_k:1 * d_k] for b in range(B)]
    Q = [proj[b * L:(b + 1) * L, 1 * d_k:2 * d_k] for b in range(B)]
    V = [proj[b * L:(b + 1) * L, 2 * d_k:2 * d_k + d_v] for b in range(B)]

    # E_b = K_b @ Q_b^T  (contract on the feature axis of both -> no explicit
    # transpose node).  Matches torch.matmul(K, Q.permute(0, 2, 1)).
    E = [lax.dot_general(K[b], Q[b], (((1,), (1,)), ((), ())),
                         preferred_element_type=jnp.float32)
         for b in range(B)]

    # nn.Softmax(dim=0): normalize over the batch axis -> purely elementwise
    # max / exp / sum across the B stacked (L, L) tiles.  The 1/sqrt(d_k)
    # scale is folded into the exp argument (equivalent since scale > 0 and
    # the max is subtracted over the same axis).
    scale = 1.0 / math.sqrt(d_k)
    m = E[0]
    for b in range(1, B):
        m = jnp.maximum(m, E[b])
    ex = [jnp.exp((E[b] - m) * scale) for b in range(B)]
    s = ex[0]
    for b in range(1, B):
        s = s + ex[b]
    inv = pl.reciprocal(s, approx=True)        # EUP vrcp slot, off the VALU
    A = [ex[b] * inv for b in range(B)]

    # --- Y_b = A_b @ V_b ; per-batch static sublane store (no relayout). ---
    for b in range(B):
        y_ref[b * L:(b + 1) * L, :] = jnp.dot(
            A[b], V[b], preferred_element_type=jnp.float32)


def fuse_qkv_params(wk, bk, wq, bq, wv, bv):
    """Fuse the three projections into one weight / one bias.  Call ONCE at
    parameter-init time (hoisted out of the per-call path)."""
    w_qkv = jnp.concatenate([wk, wq, wv], axis=-1)            # (D, 2*d_k+d_v)
    b_qkv = jnp.concatenate([bk.reshape(1, -1), bq.reshape(1, -1),
                             bv.reshape(1, -1)], axis=-1)     # (1, 2*d_k+d_v)
    return w_qkv, b_qkv


@functools.partial(jax.jit, static_argnames=("d_k", "d_v"))
def attention1d(x, w_qkv, b_qkv, *, d_k, d_v):
    """x: (B, L, d_input); w_qkv/b_qkv from fuse_qkv_params."""
    B, L, D = x.shape
    x2d = x.reshape(B * L, D)                  # free reshape at the XLA level
    vmem = pl.BlockSpec(memory_space=pltpu.MemorySpace.VMEM)
    y2d = pl.pallas_call(
        functools.partial(_attention1d_kernel, B=B, L=L, d_k=d_k, d_v=d_v),
        out_shape=jax.ShapeDtypeStruct((B * L, d_v), jnp.float32),
        in_specs=[vmem, vmem, vmem],
        out_specs=vmem,
    )(x2d, w_qkv, b_qkv)
    return y2d.reshape(B, L, d_v)


def attention1d_ref(x, wk, bk, wq, bq, wv, bv):
    """Pure-JAX reference mirroring the PyTorch forward exactly."""
    K = x @ wk + bk
    Q = x @ wq + bq
    V = x @ wv + bv
    E = jnp.einsum("bik,bjk->bij", K, Q) / math.sqrt(K.shape[-1])
    A = jax.nn.softmax(E, axis=0)              # nn.Softmax(dim=0)
    return jnp.einsum("bij,bjv->biv", A, V)


if __name__ == "__main__":
    # Small shapes consistent with the module's forward: X is (B, L, d_input).
    B, L, d_input, d_k, d_v = 2, 8, 32, 16, 16

    key = jax.random.PRNGKey(0)
    kx, kwk, kbk, kwq, kbq, kwv, kbv = jax.random.split(key, 7)

    x = jax.random.normal(kx, (B, L, d_input), dtype=jnp.float32)

    # Deterministic parameter init (same fan-in scaling as nn.Linear default).
    bound = 1.0 / math.sqrt(d_input)
    wk = jax.random.uniform(kwk, (d_input, d_k), jnp.float32, -bound, bound)
    bk = jax.random.uniform(kbk, (1, d_k), jnp.float32, -bound, bound)
    wq = jax.random.uniform(kwq, (d_input, d_k), jnp.float32, -bound, bound)
    bq = jax.random.uniform(kbq, (1, d_k), jnp.float32, -bound, bound)
    wv = jax.random.uniform(kwv, (d_input, d_v), jnp.float32, -bound, bound)
    bv = jax.random.uniform(kbv, (1, d_v), jnp.float32, -bound, bound)

    # QKV fusion happens once, at "init time", not per call.
    w_qkv, b_qkv = fuse_qkv_params(wk, bk, wq, bq, wv, bv)

    y = attention1d(x, w_qkv, b_qkv, d_k=d_k, d_v=d_v)
    y = jax.block_until_ready(y)

    y_ref = attention1d_ref(x, wk, bk, wq, bq, wv, bv)
    assert y.shape == (B, L, d_v)
    # Tolerance relaxed from 1e-5 because of pl.reciprocal(approx=True).
    assert jnp.allclose(y, y_ref, atol=5e-3, rtol=5e-3), (
        "mismatch vs reference, max abs err = "
        f"{float(jnp.max(jnp.abs(y - y_ref)))}")

    print("KERNEL_OK")
</pallas_src>

<mosaic_0001>
module attributes {stable_mosaic.version = 11 : i64} {
  func.func @_attention1d_kernel(%arg0: memref<16x32xf32, #tpu.memory_space<vmem>>, %arg1: memref<32x48xf32, #tpu.memory_space<vmem>>, %arg2: memref<1x48xf32, #tpu.memory_space<vmem>>, %arg3: memref<16x16xf32, #tpu.memory_space<vmem>>) attributes {dimension_semantics = [], scalar_prefetch = 0 : i64, scratch_operands = 0 : i64, tpu.core_type = #tpu.core_type<tc>} {
    %c0 = arith.constant 0 : index
    %c0_0 = arith.constant 0 : index
    %0 = vector.load %arg0[%c0, %c0_0] : memref<16x32xf32, #tpu.memory_space<vmem>>, vector<16x32xf32>
    %c0_1 = arith.constant 0 : index
    %c0_2 = arith.constant 0 : index
    %1 = vector.load %arg1[%c0_1, %c0_2] : memref<32x48xf32, #tpu.memory_space<vmem>>, vector<32x48xf32>
    %cst = arith.constant dense<0.000000e+00> : vector<16x48xf32>
    %2 = tpu.matmul %0, %1, %cst {dimension_numbers = #tpu.dot_dimension_numbers<[1], [0], [0], [1], [0, 0, 1, 1], [], []>} : vector<16x32xf32>, vector<32x48xf32>, vector<16x48xf32> -> vector<16x48xf32>
    %c0_3 = arith.constant 0 : index
    %c0_4 = arith.constant 0 : index
    %3 = vector.load %arg2[%c0_3, %c0_4] : memref<1x48xf32, #tpu.memory_space<vmem>>, vector<1x48xf32>
    %4 = vector.broadcast %3 : vector<1x48xf32> to vector<16x48xf32>
    %5 = arith.addf %2, %4 : vector<16x48xf32>
    %6 = vector.extract_strided_slice %5 {offsets = [0, 0], sizes = [8, 16], strides = [1, 1]} : vector<16x48xf32> to vector<8x16xf32>
    %7 = vector.extract_strided_slice %5 {offsets = [8, 0], sizes = [8, 16], strides = [1, 1]} : vector<16x48xf32> to vector<8x16xf32>
    %8 = vector.extract_strided_slice %5 {offsets = [0, 16], sizes = [8, 16], strides = [1, 1]} : vector<16x48xf32> to vector<8x16xf32>
    %9 = vector.extract_strided_slice %5 {offsets = [8, 16], sizes = [8, 16], strides = [1, 1]} : vector<16x48xf32> to vector<8x16xf32>
    %10 = vector.extract_strided_slice %5 {offsets = [0, 32], sizes = [8, 16], strides = [1, 1]} : vector<16x48xf32> to vector<8x16xf32>
    %11 = vector.extract_strided_slice %5 {offsets = [8, 32], sizes = [8, 16], strides = [1, 1]} : vector<16x48xf32> to vector<8x16xf32>
    %cst_5 = arith.constant dense<0.000000e+00> : vector<8x8xf32>
    %12 = tpu.matmul %6, %8, %cst_5 {dimension_numbers = #tpu.dot_dimension_numbers<[1], [1], [0], [0], [0, 0, 1, 0], [], []>} : vector<8x16xf32>, vector<8x16xf32>, vector<8x8xf32> -> vector<8x8xf32>
    %cst_6 = arith.constant dense<0.000000e+00> : vector<8x8xf32>
    %13 = tpu.matmul %7, %9, %cst_6 {dimension_numbers = #tpu.dot_dimension_numbers<[1], [1], [0], [0], [0, 0, 1, 0], [], []>} : vector<8x16xf32>, vector<8x16xf32>, vector<8x8xf32> -> vector<8x8xf32>
    %14 = arith.maximumf %12, %13 : vector<8x8xf32>
    %15 = arith.subf %12, %14 : vector<8x8xf32>
    %cst_7 = arith.constant 2.500000e-01 : f32
    %16 = vector.broadcast %cst_7 : f32 to vector<8x8xf32>
    %17 = arith.mulf %15, %16 : vector<8x8xf32>
    %18 = math.exp %17 : vector<8x8xf32>
    %19 = arith.subf %13, %14 : vector<8x8xf32>
    %cst_8 = arith.constant 2.500000e-01 : f32
    %20 = vector.broadcast %cst_8 : f32 to vector<8x8xf32>
    %21 = arith.mulf %19, %20 : vector<8x8xf32>
    %22 = math.exp %21 : vector<8x8xf32>
    %23 = arith.addf %18, %22 : vector<8x8xf32>
    %24 = tpu.reciprocal %23 {approx = true} : vector<8x8xf32> -> vector<8x8xf32>
    %25 = arith.mulf %18, %24 : vector<8x8xf32>
    %26 = arith.mulf %22, %24 : vector<8x8xf32>
    %cst_9 = arith.constant dense<0.000000e+00> : vector<8x16xf32>
    %27 = tpu.matmul %25, %10, %cst_9 {dimension_numbers = #tpu.dot_dimension_numbers<[1], [0], [0], [1], [0, 0, 1, 1], [], []>} : vector<8x8xf32>, vector<8x16xf32>, vector<8x16xf32> -> vector<8x16xf32>
    %c0_10 = arith.constant 0 : index
    %c0_11 = arith.constant 0 : index
    %28 = vector.load %arg3[%c0_10, %c0_11] : memref<16x16xf32, #tpu.memory_space<vmem>>, vector<8x16xf32>
    tpu.vector_store %arg3[%c0_10, %c0_11], %27 {strides = array<i32>} : memref<16x16xf32, #tpu.memory_space<vmem>>, vector<8x16xf32>,
    %cst_12 = arith.constant dense<0.000000e+00> : vector<8x16xf32>
    %29 = tpu.matmul %26, %11, %cst_12 {dimension_numbers = #tpu.dot_dimension_numbers<[1], [0], [0], [1], [0, 0, 1, 1], [], []>} : vector<8x8xf32>, vector<8x16xf32>, vector<8x16xf32> -> vector<8x16xf32>
    %c8 = arith.constant 8 : index
    %c0_13 = arith.constant 0 : index
    %30 = vector.load %arg3[%c8, %c0_13] : memref<16x16xf32, #tpu.memory_space<vmem>>, vector<8x16xf32>
    tpu.vector_store %arg3[%c8, %c0_13], %29 {strides = array<i32>} : memref<16x16xf32, #tpu.memory_space<vmem>>, vector<8x16xf32>,
    return
  }
}

</mosaic_0001>

<llo_original>
// kernel: attention1d.1
$region0: #{attention1d.1}
  #allocation0 [shape = 'u32[]', space=smem, size = 0x4, offset = 0x4, fixed_abs, tag = 'smem constant byte address 0x4 - core index']
  #allocation1 [shape = 'u32[144,128]{1,0:T(1,128)}', space=vmem, size = 0x12000, scoped, tag = 'internal scratch']
  %s0 = inlined_call_operand.hbm [shape: f32[16,32], index: 0, kind: input, shape index: {}]
  %s1 = inlined_call_operand.hbm [shape: f32[32,48], index: 1, kind: input, shape index: {}]
  %s2 = inlined_call_operand.vmem [shape: f32[1,48], index: 2, kind: input, shape index: {}]
  %s3 = inlined_call_operand.hbm [shape: f32[16,16], index: 3, kind: output, shape index: {}]
  %s4 = sld [smem:[#allocation0]]
  $region30: #{attention1d.1} parent=0
    _
  %s6 = ssub.s32 1, %s4
  %s7 = scalar_select 0, %s6, %s4
  $region1: #{attention1d.1} parent=0
    #allocation2 [shape = 'u8[8192]{0}', space=vmem, size = 0x2000, scoped, tag = 'input window, operand 0, single buffered']
    #allocation3 [shape = 's32[1]{0}', space=sflag, size = 0x4, scoped, tag = 'scoped memory for attention1d.1']
    #allocation4 [shape = 's32[1]{0}', space=sflag, size = 0x4, scoped, tag = 'scoped memory for attention1d.1']
    #allocation5 [shape = 'u8[16384]{0}', space=vmem, size = 0x4000, scoped, tag = 'input window, operand 1, single buffered']
    #allocation6 [shape = 's32[1]{0}', space=sflag, size = 0x4, scoped, tag = 'scoped memory for attention1d.1']
    #allocation7 [shape = 'u8[8192]{0}', space=vmem, size = 0x2000, scoped, tag = 'output window, operand 0, single buffered']
    %8 = vsyncpa [#allocation3], 0
    %9 = vsyncpa [#allocation6], 0
    %10 = vsyncpa [#allocation4], 0
    // Predicated region
    $region2: #{attention1d.1} parent=1 // pred_check
      _
    $region3: #{attention1d.1} parent=1 // pred_check_branch
      %12 = sbr.rel (0) target = $region5
    $region4: #{attention1d.1} parent=1 // pred_region
      %s14 = ssub.s32 256, 256
      %15 = vsyncadd [#allocation3], %s14
      %s16 = sshll.u32 [#allocation2], 4
      %s17 = int_to_ptr.vmem [resolvable:$true] %s16
      %22 = dma.hbm_to_vmem [thread:$0]  %s0, 256, %s17, [#allocation3], 128, 128, 8
    $region5: #{attention1d.1} parent=1 // pred_fallthru
      _
    // Predicated region
    $region6: #{attention1d.1} parent=1 // pred_check
      _
    $region7: #{attention1d.1} parent=1 // pred_check_branch
      %24 = sbr.rel (0) target = $region9
    $region8: #{attention1d.1} parent=1 // pred_region
      %s26 = ssub.s32 512, 512
      %27 = vsyncadd [#allocation6], %s26
      %s28 = sshll.u32 [#allocation5], 4
      %s29 = int_to_ptr.vmem [resolvable:$true] %s28
      %34 = dma.hbm_to_vmem [thread:$0]  %s1, 512, %s29, [#allocation6], 128, 128, 8
    $region9: #{attention1d.1} parent=1 // pred_fallthru
      _
    // Predicated region
    $region10: #{attention1d.1} parent=1 // pred_check
      _
    $region11: #{attention1d.1} parent=1 // pred_check_branch
      %36 = sbr.rel (0) target = $region13
    $region12: #{attention1d.1} parent=1 // pred_region
      _
    $region13: #{attention1d.1} parent=1 // pred_fallthru
      _
    // Predicated region
    $region14: #{attention1d.1} parent=1 // pred_check
      _
    $region15: #{attention1d.1} parent=1 // pred_check_branch
      %38 = sbr.rel (0) target = $region17
    $region16: #{attention1d.1} parent=1 // pred_region
      %39 = dma.done [#allocation3], 256
    $region17: #{attention1d.1} parent=1 // pred_fallthru
      _
    // Predicated region
    $region18: #{attention1d.1} parent=1 // pred_check
      _
    $region19: #{attention1d.1} parent=1 // pred_check_branch
      %41 = sbr.rel (0) target = $region21
    $region20: #{attention1d.1} parent=1 // pred_region
      %42 = dma.done [#allocation6], 512
    $region21: #{attention1d.1} parent=1 // pred_fallthru
      _
    %v43 = vld [vmem:[#allocation2] sm:$0xff]
    %v44 = vld [vmem:[#allocation2 + $0x8] sm:$0xff]
    %v45 = vld [vmem:[#allocation5] sm:$0xff]
    %v46 = vld [vmem:[#allocation5 + $0x8] sm:$0xff]
    %v47 = vld [vmem:[#allocation5 + $0x10] sm:$0xff]
    %v48 = vld [vmem:[#allocation5 + $0x18] sm:$0xff]
    %v49 = vld [vmem:[%s2] sm:$0x1]
    %v51 = vlaneseq
    %v52 = vshrl.u32 %v51, 7
    %v53 = vsub.s32 0, %v52
    %v54 = vrot.slane %v49, %v53
    %vm56 = vcmask 261120
    %v58 = vsel %vm56, %v43, 0
    %v61 = vsel %vm56, %v44, 0
    %63 = vmatprep.subr.mxu0 0.0
    %64 = vmatpush1.msra.mxu0 %v45
    %65 = vmatprep.subr.mxu0 0.0
    %66 = vmatpush1.msra.mxu0 %v46
    %67 = vmatprep.subr.mxu0 0.0
    %68 = vmatpush1.msra.mxu0 %v47
    %69 = vmatprep.subr.mxu0 0.0
    %70 = vmatpush1.msra.mxu0 %v48
    %71 = vmatprep.subr.mxu0 0.0
    %72 = vmatpush1.msra.mxu0 0.0
    %73 = vmatprep.subr.mxu0 0.0
    %74 = vmatpush1.msra.mxu0 0.0
    %75 = vmatprep.subr.mxu0 0.0
    %76 = vmatpush1.msra.mxu0 0.0
    %77 = vmatprep.subr.mxu0 0.0
    %78 = vmatpush1.msra.mxu0 0.0
    %79 = vmatprep.subr.mxu0 0.0
    %80 = vmatpush1.msra.mxu0 0.0
    %81 = vmatprep.subr.mxu0 0.0
    %82 = vmatpush1.msra.mxu0 0.0
    %83 = vmatprep.subr.mxu0 0.0
    %84 = vmatpush1.msra.mxu0 0.0
    %85 = vmatprep.subr.mxu0 0.0
    %86 = vmatpush1.msra.mxu0 0.0
    %87 = vmatprep.subr.mxu0 0.0
    %88 = vmatpush1.msra.mxu0 0.0
    %89 = vmatprep.subr.mxu0 0.0
    %90 = vmatpush1.msra.mxu0 0.0
    %91 = vmatprep.subr.mxu0 0.0
    %92 = vmatpush1.msra.mxu0 0.0
    %93 = vmatprep.subr.mxu0 0.0
    %94 = vmatpush1.msra.mxu0 0.0
    %95 = vmatprep.subr.mxu0 0.0
    %96 = vmatpush1.msra.mxu0 0.0
    %97 = vmatprep.subr.mxu0 0.0
    %98 = vmatpush1.msra.mxu0 0.0
    %99 = vmatprep.subr.mxu0 0.0
    %100 = vmatpush1.msra.mxu0 0.0
    %101 = vmatprep.subr.mxu0 0.0
    %102 = vmatpush1.msra.mxu0 0.0
    %103 = vmatprep.subr.mxu0 0.0
    %104 = vmatpush1.msra.mxu0 0.0
    %105 = vmatprep.subr.mxu0 0.0
    %106 = vmatpush1.msra.mxu0 0.0
    %107 = vmatprep.subr.mxu0 0.0
    %108 = vmatpush1.msra.mxu0 0.0
    %109 = vmatprep.subr.mxu0 0.0
    %110 = vmatpush1.msra.mxu0 0.0
    %111 = vmatprep.subr.mxu0 0.0
    %112 = vmatpush1.msra.mxu0 0.0
    %113 = vmatprep.subr.mxu0 0.0
    %114 = vmatpush1.msra.mxu0 0.0
    %115 = vmatprep.subr.mxu0 0.0
    %116 = vmatpush1.msra.mxu0 0.0
    %117 = vmatprep.subr.mxu0 0.0
    %118 = vmatpush1.msra.mxu0 0.0
    %119 = vmatprep.subr.mxu0 0.0
    %120 = vmatpush1.msra.mxu0 0.0
    %121 = vmatprep.subr.mxu0 0.0
    %122 = vmatpush1.msra.mxu0 0.0
    %123 = vmatprep.subr.mxu0 0.0
    %124 = vmatpush1.msra.mxu0 0.0
    %125 = vmatprep.subr.mxu0 0.0
    %126 = vmatpush1.msra.mxu0 0.0
    %127 = vmatprep.mubr.f32.mxu0 0.0
    %128 = vmatmul.mubr.f32.gmra.mrb[0].mxu0 %v58
    %v129 = vpop.f32.mrb[0].mxu0
    %v130 = vadd.f32 %v54, %v129
    %v131 = vpop.f32.mrb[0].mxu0
    %132 = vmatprep.mubr.f32.mxu0 0.0
    %133 = vmatmul.mubr.f32.gmra.mrb[0].mxu0 %v61
    %v134 = vpop.f32.mrb[0].mxu0
    %v135 = vadd.f32 %v54, %v134
    %v136 = vpop.f32.mrb[0].mxu0
    %137 = vdwg.mxu0
    %139 = vrot.lane.b32.xlu0 %v130, 112
    %v140 = vpop.permute.xlu0 %139
    %vm141 = vcmask 130048
    %v142 = vsel %vm141, %v130, 0
    %v144 = vsel %vm141, %v140, 0
    %146 = vmatprep.subr.mxu0 0.0
    %147 = vmatpush1.xpose.msra.mxu0 %v144
    %148 = vmatprep.subr.mxu0 0.0
    %149 = vmatpush1.xpose.msra.mxu0 0.0
    %150 = vmatprep.subr.mxu0 0.0
    %151 = vmatpush1.xpose.msra.mxu0 0.0
    %152 = vmatprep.subr.mxu0 0.0
    %153 = vmatpush1.xpose.msra.mxu0 0.0
    %154 = vmatprep.subr.mxu0 0.0
    %155 = vmatpush1.xpose.msra.mxu0 0.0
    %156 = vmatprep.subr.mxu0 0.0
    %157 = vmatpush1.xpose.msra.mxu0 0.0
    %158 = vmatprep.subr.mxu0 0.0
    %159 = vmatpush1.xpose.msra.mxu0 0.0
    %160 = vmatprep.subr.mxu0 0.0
    %161 = vmatpush1.xpose.msra.mxu0 0.0
    %162 = vmatprep.subr.mxu0 0.0
    %163 = vmatpush1.xpose.msra.mxu0 0.0
    %164 = vmatprep.subr.mxu0 0.0
    %165 = vmatpush1.xpose.msra.mxu0 0.0
    %166 = vmatprep.subr.mxu0 0.0
    %167 = vmatpush1.xpose.msra.mxu0 0.0
    %168 = vmatprep.subr.mxu0 0.0
    %169 = vmatpush1.xpose.msra.mxu0 0.0
    %170 = vmatprep.subr.mxu0 0.0
    %171 = vmatpush1.xpose.msra.mxu0 0.0
    %172 = vmatprep.subr.mxu0 0.0
    %173 = vmatpush1.xpose.msra.mxu0 0.0
    %174 = vmatprep.subr.mxu0 0.0
    %175 = vmatpush1.xpose.msra.mxu0 0.0
    %176 = vmatprep.subr.mxu0 0.0
    %177 = vmatpush1.xpose.msra.mxu0 0.0
    %178 = vmatprep.subr.mxu0 0.0
    %179 = vmatpush1.xpose.msra.mxu0 0.0
    %180 = vmatprep.subr.mxu0 0.0
    %181 = vmatpush1.xpose.msra.mxu0 0.0
    %182 = vmatprep.subr.mxu0 0.0
    %183 = vmatpush1.xpose.msra.mxu0 0.0
    %184 = vmatprep.subr.mxu0 0.0
    %185 = vmatpush1.xpose.msra.mxu0 0.0
    %186 = vmatprep.subr.mxu0 0.0
    %187 = vmatpush1.xpose.msra.mxu0 0.0
    %188 = vmatprep.subr.mxu0 0.0
    %189 = vmatpush1.xpose.msra.mxu0 0.0
    %190 = vmatprep.subr.mxu0 0.0
    %191 = vmatpush1.xpose.msra.mxu0 0.0
    %192 = vmatprep.subr.mxu0 0.0
    %193 = vmatpush1.xpose.msra.mxu0 0.0
    %194 = vmatprep.subr.mxu0 0.0
    %195 = vmatpush1.xpose.msra.mxu0 0.0
    %196 = vmatprep.subr.mxu0 0.0
    %197 = vmatpush1.xpose.msra.mxu0 0.0
    %198 = vmatprep.subr.mxu0 0.0
    %199 = vmatpush1.xpose.msra.mxu0 0.0
    %200 = vmatprep.subr.mxu0 0.0
    %201 = vmatpush1.xpose.msra.mxu0 0.0
    %202 = vmatprep.subr.mxu0 0.0
    %203 = vmatpush1.xpose.msra.mxu0 0.0
    %204 = vmatprep.subr.mxu0 0.0
    %205 = vmatpush1.xpose.msra.mxu0 0.0
    %206 = vmatprep.subr.mxu0 0.0
    %207 = vmatpush1.xpose.msra.mxu0 0.0
    %208 = vmatprep.subr.mxu0 0.0
    %209 = vmatpush1.xpose.msra.mxu0 0.0
    %210 = vmatprep.mubr.f32.mxu0 0.0
    %211 = vmatmul.mubr.f32.gmra.mrb[0].mxu0 %v142
    %v212 = vpop.f32.mrb[0].mxu0
    %v213 = vadd.f32 0.0, %v212
    %v214 = vpop.f32.mrb[0].mxu0
    %215 = vdwg.mxu0
    %217 = vrot.lane.b32.xlu0 %v135, 112
    %v218 = vpop.permute.xlu0 %217
    %v219 = vsel %vm141, %v135, 0
    %v221 = vsel %vm141, %v218, 0
    %223 = vmatprep.subr.mxu0 0.0
    %224 = vmatpush1.xpose.msra.mxu0 %v221
    %225 = vmatprep.subr.mxu0 0.0
    %226 = vmatpush1.xpose.msra.mxu0 0.0
    %227 = vmatprep.subr.mxu0 0.0
    %228 = vmatpush1.xpose.msra.mxu0 0.0
    %229 = vmatprep.subr.mxu0 0.0
    %230 = vmatpush1.xpose.msra.mxu0 0.0
    %231 = vmatprep.subr.mxu0 0.0
    %232 = vmatpush1.xpose.msra.mxu0 0.0
    %233 = vmatprep.subr.mxu0 0.0
    %234 = vmatpush1.xpose.msra.mxu0 0.0
    %235 = vmatprep.subr.mxu0 0.0
    %236 = vmatpush1.xpose.msra.mxu0 0.0
    %237 = vmatprep.subr.mxu0 0.0
    %238 = vmatpush1.xpose.msra.mxu0 0.0
    %239 = vmatprep.subr.mxu0 0.0
    %240 = vmatpush1.xpose.msra.mxu0 0.0
    %241 = vmatprep.subr.mxu0 0.0
    %242 = vmatpush1.xpose.msra.mxu0 0.0
    %243 = vmatprep.subr.mxu0 0.0
    %244 = vmatpush1.xpose.msra.mxu0 0.0
    %245 = vmatprep.subr.mxu0 0.0
    %246 = vmatpush1.xpose.msra.mxu0 0.0
    %247 = vmatprep.subr.mxu0 0.0
    %248 = vmatpush1.xpose.msra.mxu0 0.0
    %249 = vmatprep.subr.mxu0 0.0
    %250 = vmatpush1.xpose.msra.mxu0 0.0
    %251 = vmatprep.subr.mxu0 0.0
    %252 = vmatpush1.xpose.msra.mxu0 0.0
    %253 = vmatprep.subr.mxu0 0.0
    %254 = vmatpush1.xpose.msra.mxu0 0.0
    %255 = vmatprep.subr.mxu0 0.0
    %256 = vmatpush1.xpose.msra.mxu0 0.0
    %257 = vmatprep.subr.mxu0 0.0
    %258 = vmatpush1.xpose.msra.mxu0 0.0
    %259 = vmatprep.subr.mxu0 0.0
    %260 = vmatpush1.xpose.msra.mxu0 0.0
    %261 = vmatprep.subr.mxu0 0.0
    %262 = vmatpush1.xpose.msra.mxu0 0.0
    %263 = vmatprep.subr.mxu0 0.0
    %264 = vmatpush1.xpose.msra.mxu0 0.0
    %265 = vmatprep.subr.mxu0 0.0
    %266 = vmatpush1.xpose.msra.mxu0 0.0
    %267 = vmatprep.subr.mxu0 0.0
    %268 = vmatpush1.xpose.msra.mxu0 0.0
    %269 = vmatprep.subr.mxu0 0.0
    %270 = vmatpush1.xpose.msra.mxu0 0.0
    %271 = vmatprep.subr.mxu0 0.0
    %272 = vmatpush1.xpose.msra.mxu0 0.0
    %273 = vmatprep.subr.mxu0 0.0
    %274 = vmatpush1.xpose.msra.mxu0 0.0
    %275 = vmatprep.subr.mxu0 0.0
    %276 = vmatpush1.xpose.msra.mxu0 0.0
    %277 = vmatprep.subr.mxu0 0.0
    %278 = vmatpush1.xpose.msra.mxu0 0.0
    %279 = vmatprep.subr.mxu0 0.0
    %280 = vmatpush1.xpose.msra.mxu0 0.0
    %281 = vmatprep.subr.mxu0 0.0
    %282 = vmatpush1.xpose.msra.mxu0 0.0
    %283 = vmatprep.subr.mxu0 0.0
    %284 = vmatpush1.xpose.msra.mxu0 0.0
    %285 = vmatprep.subr.mxu0 0.0
    %286 = vmatpush1.xpose.msra.mxu0 0.0
    %287 = vmatprep.mubr.f32.mxu0 0.0
    %288 = vmatmul.mubr.f32.gmra.mrb[0].mxu0 %v219
    %v289 = vpop.f32.mrb[0].mxu0
    %v290 = vadd.f32 0.0, %v289
    %v291 = vpop.f32.mrb[0].mxu0
    %292 = vdwg.mxu0
    %v293 = vmax.f32 %v213, %v290
    %v294 = vsub.f32 %v213, %v293
    %v295 = vmul.f32 %v294, 0.25
    %v296 = vmul.f32 %v295, 1.442695
    %v297 = vpow.pop %v296
    %v298 = vsub.f32 %v290, %v293
    %v299 = vmul.f32 %v298, 0.25
    %v300 = vmul.f32 %v299, 1.442695
    %v301 = vpow.pop %v300
    %v302 = vadd.f32 %v297, %v301
    %v303 = vrcp.pop %v302
    %v304 = vmul.f32 %v297, %v303
    %v305 = vmul.f32 %v301, %v303
    %306 = vrot.lane.b32.xlu0 %v130, 96
    %v307 = vpop.permute.xlu0 %306
    %vm309 = vcmask 64512
    %v311 = vsel %vm309, %v304, 0
    %313 = vmatprep.subr.mxu0 0.0
    %314 = vmatpush1.msra.mxu0 %v307
    %315 = vmatprep.subr.mxu0 0.0
    %316 = vmatpush1.msra.mxu0 0.0
    %317 = vmatprep.subr.mxu0 0.0
    %318 = vmatpush1.msra.mxu0 0.0
    %319 = vmatprep.subr.mxu0 0.0
    %320 = vmatpush1.msra.mxu0 0.0
    %321 = vmatprep.subr.mxu0 0.0
    %322 = vmatpush1.msra.mxu0 0.0
    %323 = vmatprep.subr.mxu0 0.0
    %324 = vmatpush1.msra.mxu0 0.0
    %325 = vmatprep.subr.mxu0 0.0
    %326 = vmatpush1.msra.mxu0 0.0
    %327 = vmatprep.subr.mxu0 0.0
    %328 = vmatpush1.msra.mxu0 0.0
    %329 = vmatprep.subr.mxu0 0.0
    %330 = vmatpush1.msra.mxu0 0.0
    %331 = vmatprep.subr.mxu0 0.0
    %332 = vmatpush1.msra.mxu0 0.0
    %333 = vmatprep.subr.mxu0 0.0
    %334 = vmatpush1.msra.mxu0 0.0
    %335 = vmatprep.subr.mxu0 0.0
    %336 = vmatpush1.msra.mxu0 0.0
    %337 = vmatprep.subr.mxu0 0.0
    %338 = vmatpush1.msra.mxu0 0.0
    %339 = vmatprep.subr.mxu0 0.0
    %340 = vmatpush1.msra.mxu0 0.0
    %341 = vmatprep.subr.mxu0 0.0
    %342 = vmatpush1.msra.mxu0 0.0
    %343 = vmatprep.subr.mxu0 0.0
    %344 = vmatpush1.msra.mxu0 0.0
    %345 = vmatprep.subr.mxu0 0.0
    %346 = vmatpush1.msra.mxu0 0.0
    %347 = vmatprep.subr.mxu0 0.0
    %348 = vmatpush1.msra.mxu0 0.0
    %349 = vmatprep.subr.mxu0 0.0
    %350 = vmatpush1.msra.mxu0 0.0
    %351 = vmatprep.subr.mxu0 0.0
    %352 = vmatpush1.msra.mxu0 0.0
    %353 = vmatprep.subr.mxu0 0.0
    %354 = vmatpush1.msra.mxu0 0.0
    %355 = vmatprep.subr.mxu0 0.0
    %356 = vmatpush1.msra.mxu0 0.0
    %357 = vmatprep.subr.mxu0 0.0
    %358 = vmatpush1.msra.mxu0 0.0
    %359 = vmatprep.subr.mxu0 0.0
    %360 = vmatpush1.msra.mxu0 0.0
    %361 = vmatprep.subr.mxu0 0.0
    %362 = vmatpush1.msra.mxu0 0.0
    %363 = vmatprep.subr.mxu0 0.0
    %364 = vmatpush1.msra.mxu0 0.0
    %365 = vmatprep.subr.mxu0 0.0
    %366 = vmatpush1.msra.mxu0 0.0
    %367 = vmatprep.subr.mxu0 0.0
    %368 = vmatpush1.msra.mxu0 0.0
    %369 = vmatprep.subr.mxu0 0.0
    %370 = vmatpush1.msra.mxu0 0.0
    %371 = vmatprep.subr.mxu0 0.0
    %372 = vmatpush1.msra.mxu0 0.0
    %373 = vmatprep.subr.mxu0 0.0
    %374 = vmatpush1.msra.mxu0 0.0
    %375 = vmatprep.subr.mxu0 0.0
    %376 = vmatpush1.msra.mxu0 0.0
    %377 = vmatprep.mubr.f32.mxu0 0.0
    %378 = vmatmul.mubr.f32.gmra.mrb[0].mxu0 %v311
    %v379 = vpop.f32.mrb[0].mxu0
    %v380 = vadd.f32 0.0, %v379
    %v381 = vpop.f32.mrb[0].mxu0
    %382 = vdwg.mxu0
    %383 = vst.msk [vmem:[#allocation7] sm:$0xff] %vm141, %v380
    %384 = vrot.lane.b32.xlu0 %v135, 96
    %v385 = vpop.permute.xlu0 %384
    %v388 = vsel %vm309, %v305, 0
    %390 = vmatprep.subr.mxu0 0.0
    %391 = vmatpush1.msra.mxu0 %v385
    %392 = vmatprep.subr.mxu0 0.0
    %393 = vmatpush1.msra.mxu0 0.0
    %394 = vmatprep.subr.mxu0 0.0
    %395 = vmatpush1.msra.mxu0 0.0
    %396 = vmatprep.subr.mxu0 0.0
    %397 = vmatpush1.msra.mxu0 0.0
    %398 = vmatprep.subr.mxu0 0.0
    %399 = vmatpush1.msra.mxu0 0.0
    %400 = vmatprep.subr.mxu0 0.0
    %401 = vmatpush1.msra.mxu0 0.0
    %402 = vmatprep.subr.mxu0 0.0
    %403 = vmatpush1.msra.mxu0 0.0
    %404 = vmatprep.subr.mxu0 0.0
    %405 = vmatpush1.msra.mxu0 0.0
    %406 = vmatprep.subr.mxu0 0.0
    %407 = vmatpush1.msra.mxu0 0.0
    %408 = vmatprep.subr.mxu0 0.0
    %409 = vmatpush1.msra.mxu0 0.0
    %410 = vmatprep.subr.mxu0 0.0
    %411 = vmatpush1.msra.mxu0 0.0
    %412 = vmatprep.subr.mxu0 0.0
    %413 = vmatpush1.msra.mxu0 0.0
    %414 = vmatprep.subr.mxu0 0.0
    %415 = vmatpush1.msra.mxu0 0.0
    %416 = vmatprep.subr.mxu0 0.0
    %417 = vmatpush1.msra.mxu0 0.0
    %418 = vmatprep.subr.mxu0 0.0
    %419 = vmatpush1.msra.mxu0 0.0
    %420 = vmatprep.subr.mxu0 0.0
    %421 = vmatpush1.msra.mxu0 0.0
    %422 = vmatprep.subr.mxu0 0.0
    %423 = vmatpush1.msra.mxu0 0.0
    %424 = vmatprep.subr.mxu0 0.0
    %425 = vmatpush1.msra.mxu0 0.0
    %426 = vmatprep.subr.mxu0 0.0
    %427 = vmatpush1.msra.mxu0 0.0
    %428 = vmatprep.subr.mxu0 0.0
    %429 = vmatpush1.msra.mxu0 0.0
    %430 = vmatprep.subr.mxu0 0.0
    %431 = vmatpush1.msra.mxu0 0.0
    %432 = vmatprep.subr.mxu0 0.0
    %433 = vmatpush1.msra.mxu0 0.0
    %434 = vmatprep.subr.mxu0 0.0
    %435 = vmatpush1.msra.mxu0 0.0
    %436 = vmatprep.subr.mxu0 0.0
    %437 = vmatpush1.msra.mxu0 0.0
    %438 = vmatprep.subr.mxu0 0.0
    %439 = vmatpush1.msra.mxu0 0.0
    %440 = vmatprep.subr.mxu0 0.0
    %441 = vmatpush1.msra.mxu0 0.0
    %442 = vmatprep.subr.mxu0 0.0
    %443 = vmatpush1.msra.mxu0 0.0
    %444 = vmatprep.subr.mxu0 0.0
    %445 = vmatpush1.msra.mxu0 0.0
    %446 = vmatprep.subr.mxu0 0.0
    %447 = vmatpush1.msra.mxu0 0.0
    %448 = vmatprep.subr.mxu0 0.0
    %449 = vmatpush1.msra.mxu0 0.0
    %450 = vmatprep.subr.mxu0 0.0
    %451 = vmatpush1.msra.mxu0 0.0
    %452 = vmatprep.subr.mxu0 0.0
    %453 = vmatpush1.msra.mxu0 0.0
    %454 = vmatprep.mubr.f32.mxu0 0.0
    %455 = vmatmul.mubr.f32.gmra.mrb[0].mxu0 %v388
    %v456 = vpop.f32.mrb[0].mxu0
    %v457 = vadd.f32 0.0, %v456
    %v458 = vpop.f32.mrb[0].mxu0
    %459 = vdwg.mxu0
    %460 = vst.msk [vmem:[#allocation7 + $0x8] sm:$0xff] %vm141, %v457
    // Predicated region
    $region22: #{attention1d.1} parent=1 // pred_check
      _
    $region23: #{attention1d.1} parent=1 // pred_check_branch
      %462 = sbr.rel (0) target = $region25
    $region24: #{attention1d.1} parent=1 // pred_region
      %s464 = ssub.s32 256, 256
      %465 = vsyncadd [#allocation4], %s464
      %s466 = sshll.u32 [#allocation7], 4
      %s467 = int_to_ptr.vmem [resolvable:$true] %s466
      %472 = dma.vmem_to_hbm [thread:$0]  %s467, 256, %s3, [#allocation4], 128, 128, 8
    $region25: #{attention1d.1} parent=1 // pred_fallthru
      _
    // Predicated region
    $region26: #{attention1d.1} parent=1 // pred_check
      _
    $region27: #{attention1d.1} parent=1 // pred_check_branch
      %474 = sbr.rel (0) target = $region29
    $region28: #{attention1d.1} parent=1 // pred_region
      %475 = dma.done [#allocation4], 256
    $region29: #{attention1d.1} parent=1 // pred_fallthru
      _
    %476 = vsyncpa [#allocation3], 1
    %477 = vsyncpa [#allocation6], 1
    %478 = vsyncpa [#allocation4], 1

</llo_original>
